<compile_context>
chip_gen: v7x
topology: tpu7x:2x2x1
jax: 0.10.0
libtpu: 0.0.40
codegen_flags: <defaults>
</compile_context>

<pallas_src>
import jax
import jax.numpy as jnp
from jax.experimental import pallas as pl
from jax.experimental.pallas import tpu as pltpu


# --------------------------------------------------------------------------- #
# Kernels
# --------------------------------------------------------------------------- #
def _ffn_kernel_f32out(x_ref, w1_ref, b1_ref, w2_ref, b2_ref, o_ref):
    """One d_ff panel step; accumulates directly into the f32 output tile.

    The output block index is constant across the k (d_ff) axis, so the tile is
    VMEM-resident for the whole reduction - no separate accumulator scratch.
    """
    k = pl.program_id(1)

    # Cast the activation tile to the MXU operand dtype in-kernel (VPU cast),
    # avoiding an extra HBM pass over x in the wrapper.
    xc = x_ref[...].astype(w1_ref.dtype)
    h = jnp.dot(xc, w1_ref[...], preferred_element_type=jnp.float32)
    h = jnp.maximum(h + b1_ref[...], 0.0)          # bias + ReLU in f32 (VPU)
    contrib = jnp.dot(h.astype(w2_ref.dtype), w2_ref[...],
                      preferred_element_type=jnp.float32)

    @pl.when(k == 0)
    def _init():
        # b2 folded in once per output tile, not once per k step.
        o_ref[...] = contrib + b2_ref[...]

    @pl.when(k > 0)
    def _accum():
        o_ref[...] += contrib


def _ffn_kernel_acc(x_ref, w1_ref, b1_ref, w2_ref, b2_ref, o_ref, acc_ref):
    """Same as above but with an f32 accumulator scratch (for non-f32 outputs)."""
    k = pl.program_id(1)

    @pl.when(k == 0)
    def _init():
        acc_ref[...] = jnp.zeros_like(acc_ref)

    xc = x_ref[...].astype(w1_ref.dtype)
    h = jnp.dot(xc, w1_ref[...], preferred_element_type=jnp.float32)
    h = jnp.maximum(h + b1_ref[...], 0.0)
    acc_ref[...] += jnp.dot(h.astype(w2_ref.dtype), w2_ref[...],
                            preferred_element_type=jnp.float32)

    @pl.when(k == pl.num_programs(1) - 1)
    def _finalize():
        o_ref[...] = (acc_ref[...] + b2_ref[...]).astype(o_ref.dtype)


# --------------------------------------------------------------------------- #
# Generation-aware sizing helpers
# --------------------------------------------------------------------------- #
def _vmem_capacity_bytes():
    """Per-core VMEM capacity; conservative 64 MiB (v7x) fallback."""
    try:
        info = pltpu.get_tpu_info()
        cap = getattr(info, "vmem_capacity_bytes", None)
        if cap:
            return int(cap)
    except Exception:
        pass
    return 64 * 1024 * 1024


def _vmem_estimate(tile_t, tile_f, d_model, x_isz, w_isz, out_isz, needs_acc):
    est = (2 * tile_t * d_model * x_isz                       # x tiles (dbl-buffered)
           + 2 * tile_t * d_model * out_isz                   # out tiles (dbl-buffered)
           + 2 * (d_model * tile_f + tile_f * d_model) * w_isz  # w1 + w2 panels (dbl)
           + 2 * (tile_f + d_model) * 4                       # biases
           + tile_t * tile_f * 4                              # h (f32)
           + tile_t * tile_f * w_isz                          # h cast for 2nd matmul
           + tile_t * d_model * w_isz)                        # x tile cast
    if needs_acc:
        est += tile_t * d_model * 4                           # f32 accumulator
    return est


def _largest_aligned_divisor(total, upper, align):
    """Largest multiple of `align` that divides `total` and is <= upper, or None."""
    cand = (min(upper, total) // align) * align
    while cand >= align:
        if total % cand == 0:
            return cand
        cand -= align
    return None


def _pick_tile_t(T, pref, align):
    """Token-axis tile: divide T exactly when possible (avoids a jnp.pad pass
    over the activation slab) and expose >= 2 tiles for v7x's 2nd TensorCore."""
    if T <= pref:
        cand = _largest_aligned_divisor(T, T // 2, align) if T >= 2 * align else None
        if cand is not None:
            return cand, T                     # >= 2 token tiles, no padding
        return T, T                            # single full tile (exempt from 8-rule)
    cand = _largest_aligned_divisor(T, pref, align)
    if cand is not None:
        return cand, T                         # exact divisor, no padding
    tile_t = pref                              # ragged T: pad (rare fallback)
    return tile_t, pl.cdiv(T, tile_t) * tile_t


def _pick_tile_f(d_ff, fits):
    """d_ff reduction-panel size, bounded by the VMEM budget via `fits`."""
    if d_ff <= 1024 and fits(d_ff):
        return d_ff, d_ff
    # Exact divisors first (no weight padding); prefer wide panels (>= 512 for
    # the 256-wide v6e/v7x MXU), avoid 128 unless forced by VMEM.
    for cand in (2048, 1024, 512, 256):
        if cand <= d_ff and d_ff % cand == 0 and fits(cand):
            return cand, d_ff
    # Irregular d_ff: zero-pad up to a panel multiple (bit-exact).
    for cand in (512, 256, 128):
        if fits(cand):
            return cand, pl.cdiv(d_ff, cand) * cand
    return 128, pl.cdiv(d_ff, 128) * 128


# --------------------------------------------------------------------------- #
# Wrapper
# --------------------------------------------------------------------------- #
def prepare_ffn_params(w1, b1, w2, b2, compute_dtype=jnp.bfloat16):
    """Cast weights ONCE (call outside the per-step path so the per-call wrapper
    never re-streams an f32->bf16 weight copy through HBM)."""
    cdt = jnp.dtype(compute_dtype)
    return (jnp.asarray(w1, cdt), jnp.asarray(b1, jnp.float32),
            jnp.asarray(w2, cdt), jnp.asarray(b2, jnp.float32))


def feed_forward(x, w1, b1, w2, b2, *, compute_dtype=jnp.bfloat16):
    """x: (B, S, d_model); w1: (d_model, d_ff); b1: (d_ff,);
       w2: (d_ff, d_model); b2: (d_model,).
       compute_dtype: MXU operand dtype (default bf16); accumulation is f32.
       Pass compute_dtype=jnp.float32 (or None) for an exact f32 path."""
    B, S, d_model = x.shape
    d_ff = w1.shape[1]
    out_dtype = x.dtype
    T = B * S

    cdt = jnp.dtype(compute_dtype) if compute_dtype is not None else jnp.dtype(x.dtype)
    # No cast if the weights were prepared in the compute dtype already.
    w1c = w1 if w1.dtype == cdt else w1.astype(cdt)
    w2c = w2 if w2.dtype == cdt else w2.astype(cdt)
    # Biases stay f32: bias-add / ReLU run in f32 on the VPU (v5e has no bf16 VPU).
    b1_2d = b1.reshape(1, d_ff).astype(jnp.float32)
    b2_2d = b2.reshape(1, d_model).astype(jnp.float32)
    x2d = x.reshape(T, d_model)                 # no dtype cast here (done in-kernel)

    x_isz = jnp.dtype(x.dtype).itemsize
    w_isz = cdt.itemsize
    out_isz = jnp.dtype(out_dtype).itemsize
    needs_acc = jnp.dtype(out_dtype) != jnp.dtype(jnp.float32)

    # ---- generation-aware VMEM budget ----
    cap = _vmem_capacity_bytes()
    budget = int(0.70 * cap)

    # ---- token-axis tiling ----
    align = 16 if w_isz == 2 else 8            # bf16 native sublane tile is (16,128)
    pref = 1024 if w_isz == 2 else 512         # clears the v6e/v5e weight-DMA roofline
    tile_t, t_pad = _pick_tile_t(T, pref, align)

    def est(tt, tf):
        return _vmem_estimate(tt, tf, d_model, x_isz, w_isz, out_isz, needs_acc)

    # If even the narrowest d_ff panel would overflow VMEM (huge d_model on v7x),
    # shrink the token tile (halving preserves divisibility of t_pad).
    while (est(tile_t, 128) > budget and tile_t // 2 >= align
           and (tile_t // 2) % align == 0):
        tile_t //= 2
    if t_pad != T and tile_t != pref:
        t_pad = pl.cdiv(T, tile_t) * tile_t

    # ---- d_ff reduction tiling (VMEM/d_model-aware) ----
    tile_f, d_ff_pad = _pick_tile_f(d_ff, lambda tf: est(tile_t, tf) <= budget)

    # ---- padding (rare fallbacks; zero-padding is bit-exact) ----
    if t_pad != T:
        x2d = jnp.pad(x2d, ((0, t_pad - T), (0, 0)))
    if d_ff_pad != d_ff:
        # TODO(synk): for irregular d_ff, pre-pad the weights once alongside
        # prepare_ffn_params to avoid this per-call pass over the weights.
        w1c = jnp.pad(w1c, ((0, 0), (0, d_ff_pad - d_ff)))
        b1_2d = jnp.pad(b1_2d, ((0, 0), (0, d_ff_pad - d_ff)))
        w2c = jnp.pad(w2c, ((0, d_ff_pad - d_ff), (0, 0)))

    grid = (t_pad // tile_t, d_ff_pad // tile_f)
    vmem_limit = int(min(0.90 * cap, max(budget, 1.25 * est(tile_t, tile_f))))

    kernel = _ffn_kernel_acc if needs_acc else _ffn_kernel_f32out
    scratch = ([pltpu.VMEM((tile_t, d_model), jnp.float32)] if needs_acc else [])

    out = pl.pallas_call(
        kernel,
        out_shape=jax.ShapeDtypeStruct((t_pad, d_model), out_dtype),
        grid=grid,
        in_specs=[
            pl.BlockSpec((tile_t, d_model), lambda i, k: (i, 0)),   # x tile
            pl.BlockSpec((d_model, tile_f), lambda i, k: (0, k)),   # w1 panel
            pl.BlockSpec((1, tile_f), lambda i, k: (0, k)),         # b1 panel
            pl.BlockSpec((tile_f, d_model), lambda i, k: (k, 0)),   # w2 panel
            pl.BlockSpec((1, d_model), lambda i, k: (0, 0)),        # b2 (resident)
        ],
        out_specs=pl.BlockSpec((tile_t, d_model), lambda i, k: (i, 0)),
        scratch_shapes=scratch,
        compiler_params=pltpu.CompilerParams(
            dimension_semantics=("parallel", "arbitrary"),
            vmem_limit_bytes=vmem_limit),
    )(x2d, w1c, b1_2d, w2c, b2_2d)

    if t_pad != T:
        out = out[:T]
    return out.reshape(B, S, d_model)


def init_params(key, d_model, d_ff, dtype=jnp.float32):
    """Mimics nn.Linear's uniform(-1/sqrt(fan_in), 1/sqrt(fan_in)) init.
    Stored as (in, out) so the kernel computes x @ W directly (== x @ W_pt.T)."""
    k1, k2, k3, k4 = jax.random.split(key, 4)
    lim1 = 1.0 / (d_model ** 0.5)
    lim2 = 1.0 / (d_ff ** 0.5)
    w1 = jax.random.uniform(k1, (d_model, d_ff), dtype, -lim1, lim1)
    b1 = jax.random.uniform(k2, (d_ff,), dtype, -lim1, lim1)
    w2 = jax.random.uniform(k3, (d_ff, d_model), dtype, -lim2, lim2)
    b2 = jax.random.uniform(k4, (d_model,), dtype, -lim2, lim2)
    return w1, b1, w2, b2


if __name__ == "__main__":
    key = jax.random.PRNGKey(0)
    B, S, d_model, d_ff = 2, 8, 32, 64
    kx, kp = jax.random.split(key)
    x = jax.random.normal(kx, (B, S, d_model), jnp.float32)
    w1, b1, w2, b2 = init_params(kp, d_model, d_ff)

    # Pure-JAX reference
    ref = jnp.maximum(x @ w1 + b1, 0.0) @ w2 + b2

    # Exact f32 operand path
    y32 = feed_forward(x, w1, b1, w2, b2, compute_dtype=jnp.float32)
    jax.block_until_ready(y32)
    assert y32.shape == (B, S, d_model)
    assert jnp.allclose(y32, ref, atol=1e-5, rtol=1e-5)

    # Default path: bf16 MXU operands + f32 accumulation.
    # Weights are cast ONCE (persistently) - no per-call weight cast in HBM.
    w1b, b1b, w2b, b2b = prepare_ffn_params(w1, b1, w2, b2, jnp.bfloat16)
    y = feed_forward(x, w1b, b1b, w2b, b2b)
    jax.block_until_ready(y)
    assert y.shape == (B, S, d_model)
    assert jnp.allclose(y, ref, atol=5e-2, rtol=5e-2)

    # bf16 activations/outputs (exercises the accumulator-scratch kernel)
    ybf = feed_forward(x.astype(jnp.bfloat16), w1b, b1b, w2b, b2b)
    jax.block_until_ready(ybf)
    assert ybf.dtype == jnp.bfloat16
    assert jnp.allclose(ybf.astype(jnp.float32), ref, atol=1e-1, rtol=1e-1)

    print("KERNEL_OK")
</pallas_src>

<mosaic_0001>
module attributes {stable_mosaic.version = 11 : i64} {
  func.func @_ffn_kernel_f32out(%arg0: i32, %arg1: i32, %arg2: memref<8x32xf32, #tpu.memory_space<vmem>>, %arg3: memref<32x64xf32, #tpu.memory_space<vmem>>, %arg4: memref<1x64xf32, #tpu.memory_space<vmem>>, %arg5: memref<64x32xf32, #tpu.memory_space<vmem>>, %arg6: memref<1x32xf32, #tpu.memory_space<vmem>>, %arg7: memref<8x32xf32, #tpu.memory_space<vmem>>) attributes {dimension_semantics = [#tpu.dimension_semantics<parallel>, #tpu.dimension_semantics<arbitrary>], iteration_bounds = array<i64: 2, 1>, scalar_prefetch = 0 : i64, scratch_operands = 0 : i64, tpu.core_type = #tpu.core_type<tc>, window_params = [{transform_indices = @transform_0, window_bounds = array<i64: 8, 32>}, {transform_indices = @transform_1, window_bounds = array<i64: 32, 64>}, {transform_indices = @transform_2, window_bounds = array<i64: 1, 64>}, {transform_indices = @transform_3, window_bounds = array<i64: 64, 32>}, {pipeline_mode = #tpu.pipeline_mode<synchronous>, transform_indices = @transform_4, window_bounds = array<i64: 1, 32>}, {transform_indices = @transform_5, window_bounds = array<i64: 8, 32>}]} {
    %c0 = arith.constant 0 : index
    %c0_0 = arith.constant 0 : index
    %0 = vector.load %arg2[%c0, %c0_0] : memref<8x32xf32, #tpu.memory_space<vmem>>, vector<8x32xf32>
    %c0_1 = arith.constant 0 : index
    %c0_2 = arith.constant 0 : index
    %1 = vector.load %arg3[%c0_1, %c0_2] : memref<32x64xf32, #tpu.memory_space<vmem>>, vector<32x64xf32>
    %cst = arith.constant dense<0.000000e+00> : vector<8x64xf32>
    %2 = tpu.matmul %0, %1, %cst {dimension_numbers = #tpu.dot_dimension_numbers<[1], [0], [0], [1], [0, 0, 1, 1], [], []>} : vector<8x32xf32>, vector<32x64xf32>, vector<8x64xf32> -> vector<8x64xf32>
    %c0_3 = arith.constant 0 : index
    %c0_4 = arith.constant 0 : index
    %3 = vector.load %arg4[%c0_3, %c0_4] : memref<1x64xf32, #tpu.memory_space<vmem>>, vector<1x64xf32>
    %4 = vector.broadcast %3 : vector<1x64xf32> to vector<8x64xf32>
    %5 = arith.addf %2, %4 : vector<8x64xf32>
    %cst_5 = arith.constant 0.000000e+00 : f32
    %6 = vector.broadcast %cst_5 : f32 to vector<8x64xf32>
    %7 = arith.maximumf %5, %6 : vector<8x64xf32>
    %c0_6 = arith.constant 0 : index
    %c0_7 = arith.constant 0 : index
    %8 = vector.load %arg5[%c0_6, %c0_7] : memref<64x32xf32, #tpu.memory_space<vmem>>, vector<64x32xf32>
    %cst_8 = arith.constant dense<0.000000e+00> : vector<8x32xf32>
    %9 = tpu.matmul %7, %8, %cst_8 {dimension_numbers = #tpu.dot_dimension_numbers<[1], [0], [0], [1], [0, 0, 1, 1], [], []>} : vector<8x64xf32>, vector<64x32xf32>, vector<8x32xf32> -> vector<8x32xf32>
    %c0_i32 = arith.constant 0 : i32
    %10 = arith.cmpi eq, %arg1, %c0_i32 : i32
    %11 = arith.extui %10 : i1 to i32
    %c0_i32_9 = arith.constant 0 : i32
    %12 = arith.cmpi ne, %11, %c0_i32_9 : i32
    scf.if %12 {
      %c0_12 = arith.constant 0 : index
      %c0_13 = arith.constant 0 : index
      %16 = vector.load %arg6[%c0_12, %c0_13] : memref<1x32xf32, #tpu.memory_space<vmem>>, vector<1x32xf32>
      %17 = vector.broadcast %16 : vector<1x32xf32> to vector<8x32xf32>
      %18 = arith.addf %9, %17 : vector<8x32xf32>
      %c0_14 = arith.constant 0 : index
      %c0_15 = arith.constant 0 : index
      %19 = vector.load %arg7[%c0_14, %c0_15] : memref<8x32xf32, #tpu.memory_space<vmem>>, vector<8x32xf32>
      tpu.vector_store %arg7[%c0_14, %c0_15], %18 {strides = array<i32>} : memref<8x32xf32, #tpu.memory_space<vmem>>, vector<8x32xf32>,
    } else {
    }
    %c0_i32_10 = arith.constant 0 : i32
    %13 = arith.cmpi sgt, %arg1, %c0_i32_10 : i32
    %14 = arith.extui %13 : i1 to i32
    %c0_i32_11 = arith.constant 0 : i32
    %15 = arith.cmpi ne, %14, %c0_i32_11 : i32
    scf.if %15 {
      %c0_12 = arith.constant 0 : index
      %c0_13 = arith.constant 0 : index
      %16 = vector.load %arg7[%c0_12, %c0_13] : memref<8x32xf32, #tpu.memory_space<vmem>>, vector<8x32xf32>
      %17 = arith.addf %16, %9 : vector<8x32xf32>
      %c0_14 = arith.constant 0 : index
      %c0_15 = arith.constant 0 : index
      %18 = vector.load %arg7[%c0_14, %c0_15] : memref<8x32xf32, #tpu.memory_space<vmem>>, vector<8x32xf32>
      tpu.vector_store %arg7[%c0_14, %c0_15], %17 {strides = array<i32>} : memref<8x32xf32, #tpu.memory_space<vmem>>, vector<8x32xf32>,
    } else {
    }
    return
  }
  func.func @transform_0(%arg0: i32, %arg1: i32) -> (i32, i32) {
    %c0_i32 = arith.constant 0 : i32
    %c0_i32_0 = arith.constant 0 : i32
    return %arg0, %c0_i32 : i32, i32
  }
  func.func @transform_1(%arg0: i32, %arg1: i32) -> (i32, i32) {
    %c0_i32 = arith.constant 0 : i32
    %c0_i32_0 = arith.constant 0 : i32
    return %c0_i32, %arg1 : i32, i32
  }
  func.func @transform_2(%arg0: i32, %arg1: i32) -> (i32, i32) {
    %c0_i32 = arith.constant 0 : i32
    %c0_i32_0 = arith.constant 0 : i32
    return %c0_i32, %arg1 : i32, i32
  }
  func.func @transform_3(%arg0: i32, %arg1: i32) -> (i32, i32) {
    %c0_i32 = arith.constant 0 : i32
    %c0_i32_0 = arith.constant 0 : i32
    return %arg1, %c0_i32 : i32, i32
  }
  func.func @transform_4(%arg0: i32, %arg1: i32) -> (i32, i32) {
    %c0_i32 = arith.constant 0 : i32
    %c0_i32_0 = arith.constant 0 : i32
    %c0_i32_1 = arith.constant 0 : i32
    return %c0_i32, %c0_i32_0 : i32, i32
  }
  func.func @transform_5(%arg0: i32, %arg1: i32) -> (i32, i32) {
    %c0_i32 = arith.constant 0 : i32
    %c0_i32_0 = arith.constant 0 : i32
    return %arg0, %c0_i32 : i32, i32
  }
}

</mosaic_0001>

<llo_original>
// kernel: tpu_custom_call.1
$region0: #{tpu_custom_call.1}
  #allocation0 [shape = 'u32[]', space=smem, size = 0x4, offset = 0x4, fixed_abs, tag = 'smem constant byte address 0x4 - core index']
  #allocation1 [shape = 'u32[144,128]{1,0:T(1,128)}', space=vmem, size = 0x12000, scoped, tag = 'internal scratch']
  %s0 = inlined_call_operand.vmem [shape: f32[16,32], index: 0, kind: input, shape index: {}]
  %s1 = inlined_call_operand.vmem [shape: f32[32,64], index: 1, kind: input, shape index: {}]
  %s2 = inlined_call_operand.vmem [shape: f32[1,64], index: 2, kind: input, shape index: {}]
  %s3 = inlined_call_operand.vmem [shape: f32[64,32], index: 3, kind: input, shape index: {}]
  %s4 = inlined_call_operand.vmem [shape: f32[1,32], index: 4, kind: input, shape index: {}]
  %s5 = inlined_call_operand.hbm [shape: f32[16,32], index: 5, kind: output, shape index: {}]
  %s6 = sld [smem:[#allocation0]]
  $region61: #{tpu_custom_call.1} parent=0
    _
  %s8 = ssub.s32 1, %s6
  %s9 = scalar_select 0, %s8, %s6
  $region1: #{tpu_custom_call.1} parent=0
    #allocation2 [shape = 'u8[8192]{0}', space=vmem, size = 0x2000, scoped, tag = 'output window, operand 0']
    #allocation3 [shape = 's32[2]{0}', space=sflag, size = 0x8, scoped, tag = 'scoped memory for tpu_custom_call.1']
    %10 = vsyncpa [#allocation3], 0
    %s11 = scalar_lea.sflag [#allocation3], 1
    %12 = vsyncpa %s11, 0
    loop: start=0, step=1, limit=4
    $region2: #{tpu_custom_call.1} parent=1 // loop_pre_header
      _
    $region3: #{tpu_custom_call.1} parent=1 // loop_header
      %s14 = sphi 0, %s18
      %p15 = scmp.ge.s32.totalorder %s14, 4
      %s21 = sphi 0, %s33
      %s22 = sphi 0, %s29
      %s23 = sphi 0, %s21
      %s24 = sphi 0, %s22
      %s25 = sphi 0, %s23
      %s26 = sphi 0, %s24
      %s36 = sphi 0, %s38
      %s39 = sphi 0, %s36
      %s40 = sphi 0, %s39
      %s56 = sphi 0, %s40
      %s62 = sphi 0, %s64
      %s65 = sphi 0, %s62
      %s66 = sphi 0, %s65
      %s82 = sphi 0, %s66
      %s88 = sphi 0, %s90
      %s91 = sphi 0, %s88
      %s92 = sphi 0, %s91
      %s108 = sphi 0, %s92
      %s114 = sphi 0, %s116
      %s117 = sphi 0, %s114
      %s118 = sphi 0, %s117
      %s134 = sphi 0, %s118
      %s138 = sphi 0, %s138
      %s140 = sphi 0, %s138
      %s141 = sphi 0, %s140
      %s155 = sphi 0, %s141
      %s161 = sphi 0, %s163
      %s164 = sphi 0, %s161
      %s165 = sphi 0, %s164
      %s181 = sphi 0, %s165
    $region4: #{tpu_custom_call.1} parent=1 // loop_header_branch
      %17 = sbr.rel (%p15) target = $region8
    $region5: #{tpu_custom_call.1} parent=1 // loop_body
      %s19 = ssub.s32 %s14, 1
      %s20 = ssub.s32 %s14, 2
      %s27 = sadd.s32 1, %s22
      %p28 = scmp.ge.s32.totalorder %s27, 1
      %s29 = scalar_select %p28, 0, %s27
      %s30 = sadd.s32 1, %s21
      %s31 = scalar_select %p28, %s30, %s21
      %p32 = scmp.ge.s32.totalorder %s31, 2
      %s33 = scalar_select %p32, 0, %s31
      %s34 = ssub.s32 %s21, %s33
      %p35 = scmp.eq.s32.totalorder %s34, 0
      %s37 = sadd.s32 %s36, 1
      %s38 = scalar_select %p35, %s36, %s37
      %p41 = pneg %p35
      %p42 = scmp.eq.s32.totalorder %s14, 1
      %p43 = por %p41, %p42
      %p44 = scmp.ne.s32.totalorder %s36, %s39
      %p45 = scmp.eq.s32.totalorder %s14, 0
      %p46 = por %p44, %p45
      %p47 = scmp.ne.s32.totalorder %s36, %s39
      %p48 = scmp.eq.s32.totalorder %s19, 1
      %p49 = por %p47, %p48
      %p50 = scmp.ne.s32.totalorder %s39, %s40
      %p51 = scmp.eq.s32.totalorder %s19, 0
      %p52 = por %p50, %p51
      %p53 = scmp.ne.s32.totalorder %s39, %s40
      %p54 = scmp.eq.s32.totalorder %s20, 1
      %p55 = por %p53, %p54
      %p57 = scmp.ne.s32.totalorder %s40, %s56
      %p58 = scmp.eq.s32.totalorder %s20, 0
      %p59 = por %p57, %p58
      %s60 = ssub.s32 %s22, %s29
      %p61 = scmp.eq.s32.totalorder %s60, 0
      %s63 = sadd.s32 %s62, 1
      %s64 = scalar_select %p61, %s62, %s63
      %p67 = pneg %p61
      %p68 = scmp.eq.s32.totalorder %s14, 1
      %p69 = por %p67, %p68
      %p70 = scmp.ne.s32.totalorder %s62, %s65
      %p71 = scmp.eq.s32.totalorder %s14, 0
      %p72 = por %p70, %p71
      %p73 = scmp.ne.s32.totalorder %s62, %s65
      %p74 = scmp.eq.s32.totalorder %s19, 1
      %p75 = por %p73, %p74
      %p76 = scmp.ne.s32.totalorder %s65, %s66
      %p77 = scmp.eq.s32.totalorder %s19, 0
      %p78 = por %p76, %p77
      %p79 = scmp.ne.s32.totalorder %s65, %s66
      %p80 = scmp.eq.s32.totalorder %s20, 1
      %p81 = por %p79, %p80
      %p83 = scmp.ne.s32.totalorder %s66, %s82
      %p84 = scmp.eq.s32.totalorder %s20, 0
      %p85 = por %p83, %p84
      %s86 = ssub.s32 %s22, %s29
      %p87 = scmp.eq.s32.totalorder %s86, 0
      %s89 = sadd.s32 %s88, 1
      %s90 = scalar_select %p87, %s88, %s89
      %p93 = pneg %p87
      %p94 = scmp.eq.s32.totalorder %s14, 1
      %p95 = por %p93, %p94
      %p96 = scmp.ne.s32.totalorder %s88, %s91
      %p97 = scmp.eq.s32.totalorder %s14, 0
      %p98 = por %p96, %p97
      %p99 = scmp.ne.s32.totalorder %s88, %s91
      %p100 = scmp.eq.s32.totalorder %s19, 1
      %p101 = por %p99, %p100
      %p102 = scmp.ne.s32.totalorder %s91, %s92
      %p103 = scmp.eq.s32.totalorder %s19, 0
      %p104 = por %p102, %p103
      %p105 = scmp.ne.s32.totalorder %s91, %s92
      %p106 = scmp.eq.s32.totalorder %s20, 1
      %p107 = por %p105, %p106
      %p109 = scmp.ne.s32.totalorder %s92, %s108
      %p110 = scmp.eq.s32.totalorder %s20, 0
      %p111 = por %p109, %p110
      %s112 = ssub.s32 %s22, %s29
      %p113 = scmp.eq.s32.totalorder %s112, 0
      %s115 = sadd.s32 %s114, 1
      %s116 = scalar_select %p113, %s114, %s115
      %p119 = pneg %p113
      %p120 = scmp.eq.s32.totalorder %s14, 1
      %p121 = por %p119, %p120
      %p122 = scmp.ne.s32.totalorder %s114, %s117
      %p123 = scmp.eq.s32.totalorder %s14, 0
      %p124 = por %p122, %p123
      %p125 = scmp.ne.s32.totalorder %s114, %s117
      %p126 = scmp.eq.s32.totalorder %s19, 1
      %p127 = por %p125, %p126
      %p128 = scmp.ne.s32.totalorder %s117, %s118
      %p129 = scmp.eq.s32.totalorder %s19, 0
      %p130 = por %p128, %p129
      %p131 = scmp.ne.s32.totalorder %s117, %s118
      %p132 = scmp.eq.s32.totalorder %s20, 1
      %p133 = por %p131, %p132
      %p135 = scmp.ne.s32.totalorder %s118, %s134
      %p136 = scmp.eq.s32.totalorder %s20, 0
      %p137 = por %p135, %p136
      %s139 = sadd.s32 %s138, 1
      %p142 = scmp.eq.s32.totalorder %s14, 1
      %p143 = scmp.ne.s32.totalorder %s138, %s140
      %p144 = scmp.eq.s32.totalorder %s14, 0
      %p145 = por %p143, %p144
      %p146 = scmp.ne.s32.totalorder %s138, %s140
      %p147 = scmp.eq.s32.totalorder %s19, 1
      %p148 = por %p146, %p147
      %p149 = scmp.ne.s32.totalorder %s140, %s141
      %p150 = scmp.eq.s32.totalorder %s19, 0
      %p151 = por %p149, %p150
      %p152 = scmp.ne.s32.totalorder %s140, %s141
      %p153 = scmp.eq.s32.totalorder %s20, 1
      %p154 = por %p152, %p153
      %p156 = scmp.ne.s32.totalorder %s141, %s155
      %p157 = scmp.eq.s32.totalorder %s20, 0
      %p158 = por %p156, %p157
      %s159 = ssub.s32 %s21, %s33
      %p160 = scmp.eq.s32.totalorder %s159, 0
      %s162 = sadd.s32 %s161, 1
      %s163 = scalar_select %p160, %s161, %s162
      %p166 = pneg %p160
      %p167 = scmp.eq.s32.totalorder %s14, 1
      %p168 = por %p166, %p167
      %p169 = scmp.ne.s32.totalorder %s161, %s164
      %p170 = scmp.eq.s32.totalorder %s14, 0
      %p171 = por %p169, %p170
      %p172 = scmp.ne.s32.totalorder %s161, %s164
      %p173 = scmp.eq.s32.totalorder %s19, 1
      %p174 = por %p172, %p173
      %p175 = scmp.ne.s32.totalorder %s164, %s165
      %p176 = scmp.eq.s32.totalorder %s19, 0
      %p177 = por %p175, %p176
      %p178 = scmp.ne.s32.totalorder %s164, %s165
      %p179 = scmp.eq.s32.totalorder %s20, 1
      %p180 = por %p178, %p179
      %p182 = scmp.ne.s32.totalorder %s165, %s181
      %p183 = scmp.eq.s32.totalorder %s20, 0
      %p184 = por %p182, %p183
      %p185 = scmp.le.s32.totalorder 1, %s14
      %p186 = scmp.lt.s32.totalorder %s14, 3
      %p187 = pnand %p185, %p186
      %p188 = pneg %p187
      // Predicated region
      $region9: #{tpu_custom_call.1} parent=5 // pred_check
        _
      $region10: #{tpu_custom_call.1} parent=5 // pred_check_branch
        %190 = sbr.rel (%p187) target = $region12
      $region11: #{tpu_custom_call.1} parent=5 // pred_region
        %s191 = ssub.s32 %s14, 1
        // Predicated region
        $region13: #{tpu_custom_call.1} parent=11 // pred_check
          %p192 = pneg %p78
        $region14: #{tpu_custom_call.1} parent=11 // pred_check_branch
          %194 = sbr.rel (%p192) target = $region16
        $region15: #{tpu_custom_call.1} parent=11 // pred_region
          %p195 = scmp.lt.s32.totalorder %s24, 0
          %s196 = scalar_select %p195, %s24, 0
          %s197 = smul.addr %s196, 8
          %s198 = scalar_lea.vmem %s1, %s197
        $region16: #{tpu_custom_call.1} parent=11 // pred_fallthru
          _
        // Predicated region
        $region17: #{tpu_custom_call.1} parent=11 // pred_check
          %p199 = pneg %p104
        $region18: #{tpu_custom_call.1} parent=11 // pred_check_branch
          %201 = sbr.rel (%p199) target = $region20
        $region19: #{tpu_custom_call.1} parent=11 // pred_region
          %p202 = scmp.lt.s32.totalorder %s24, 0
          %s203 = scalar_select %p202, %s24, 0
          %s204 = scalar_lea.vmem %s2, %s203
        $region20: #{tpu_custom_call.1} parent=11 // pred_fallthru
          _
        // Predicated region
        $region21: #{tpu_custom_call.1} parent=11 // pred_check
          %p205 = pneg %p130
        $region22: #{tpu_custom_call.1} parent=11 // pred_check_branch
          %207 = sbr.rel (%p205) target = $region24
        $region23: #{tpu_custom_call.1} parent=11 // pred_region
          %s208 = smul.u32 8, %s24
          %p209 = scmp.lt.s32.totalorder %s208, 7
          %s210 = scalar_select %p209, %s208, 7
          %s211 = smul.addr %s210, 8
          %s212 = scalar_lea.vmem %s3, %s211
          %s213 = smul.u32 8, %s24
        $region24: #{tpu_custom_call.1} parent=11 // pred_fallthru
          _
        // Predicated region
        $region25: #{tpu_custom_call.1} parent=11 // pred_check
          %p214 = pneg %p151
        $region26: #{tpu_custom_call.1} parent=11 // pred_check_branch
          %216 = sbr.rel (%p214) target = $region28
        $region27: #{tpu_custom_call.1} parent=11 // pred_region
          _
        $region28: #{tpu_custom_call.1} parent=11 // pred_fallthru
          _
      $region12: #{tpu_custom_call.1} parent=5 // pred_fallthru
        _
      %p217 = scmp.lt.s32.totalorder %s14, 2
      // Predicated region
      $region29: #{tpu_custom_call.1} parent=5 // pred_check
        %p218 = pneg %p217
      $region30: #{tpu_custom_call.1} parent=5 // pred_check_branch
        %220 = sbr.rel (%p218) target = $region32
      $region31: #{tpu_custom_call.1} parent=5 // pred_region
        // Predicated region
        $region33: #{tpu_custom_call.1} parent=31 // pred_check
          %p221 = pneg %p46
        $region34: #{tpu_custom_call.1} parent=31 // pred_check_branch
          %223 = sbr.rel (%p221) target = $region36
        $region35: #{tpu_custom_call.1} parent=31 // pred_region
          %p224 = scmp.lt.s32.totalorder %s21, 1
          %s225 = scalar_select %p224, %s21, 1
          %s226 = smul.addr %s225, 8
          %s227 = scalar_lea.vmem %s0, %s226
        $region36: #{tpu_custom_call.1} parent=31 // pred_fallthru
          _
      $region32: #{tpu_custom_call.1} parent=5 // pred_fallthru
        _
      %p228 = scmp.le.s32.totalorder 1, %s14
      %p229 = scmp.lt.s32.totalorder %s14, 3
      %p230 = pnand %p228, %p229
      %p231 = pneg %p230
      // Predicated region
      $region37: #{tpu_custom_call.1} parent=5 // pred_check
        _
      $region38: #{tpu_custom_call.1} parent=5 // pred_check_branch
        %233 = sbr.rel (%p230) target = $region40
      $region39: #{tpu_custom_call.1} parent=5 // pred_region
        %s234 = ssub.s32 %s14, 1
        %p235 = scmp.lt.s32.totalorder %s23, 1
        %s236 = scalar_select %p235, %s23, 1
        %s237 = smul.addr %s236, 8
        %s238 = scalar_lea.vmem %s0, %s237
        %p239 = pneg %p52
        %p240 = pneg %p49
        %p241 = scmp.lt.s32.totalorder %s24, 0
        %s242 = scalar_select %p241, %s24, 0
        %s243 = smul.addr %s242, 8
        %s244 = scalar_lea.vmem %s1, %s243
        %p245 = pneg %p78
        %p246 = pneg %p75
        %p247 = scmp.lt.s32.totalorder %s24, 0
        %s248 = scalar_select %p247, %s24, 0
        %s249 = scalar_lea.vmem %s2, %s248
        %p250 = pneg %p104
        %p251 = pneg %p101
        %s252 = smul.u32 8, %s24
        %p253 = scmp.lt.s32.totalorder %s252, 7
        %s254 = scalar_select %p253, %s252, 7
        %s255 = smul.addr %s254, 8
        %s256 = scalar_lea.vmem %s3, %s255
        %p257 = pneg %p130
        %p258 = pneg %p127
        %p259 = pneg %p151
        %p260 = pneg %p148
        %p261 = pneg %p177
        %p262 = pneg %p174
        %s263 = sand.u32 %s164, 1
        %s264 = scalar_lea.sflag [#allocation3], %s263
        %s265 = sand.u32 %s164, 1
        %s266 = smul.addr %s265, 8
        %s267 = scalar_lea.vmem [#allocation2], %s266
        %p268 = scmp.lt.s32.totalorder %s23, 1
        %s269 = scalar_select %p268, %s23, 1
        %s270 = smul.addr %s269, 8
        %s271 = scalar_lea.vmem %s0, %s270
        %p272 = scmp.lt.s32.totalorder %s24, 0
        %s273 = scalar_select %p272, %s24, 0
        %s274 = smul.addr %s273, 8
        %s275 = scalar_lea.vmem %s1, %s274
        %p276 = scmp.lt.s32.totalorder %s24, 0
        %s277 = scalar_select %p276, %s24, 0
        %s278 = scalar_lea.vmem %s2, %s277
        %s279 = smul.u32 8, %s24
        %p280 = scmp.lt.s32.totalorder %s279, 7
        %s281 = scalar_select %p280, %s279, 7
        %s282 = smul.addr %s281, 8
        %s283 = scalar_lea.vmem %s3, %s282
        %s284 = smul.u32 8, %s24
        %v285 = vld [vmem:[%s271] sm:$0xff]
        %v286 = vld [vmem:[%s275] sm:$0xff]
        %v287 = vld [vmem:[%s275 + $0x8] sm:$0xff]
        %v288 = vld [vmem:[%s275 + $0x10] sm:$0xff]
        %v289 = vld [vmem:[%s275 + $0x18] sm:$0xff]
        %v290 = vld [vmem:[%s278] sm:$0x1]
        %v292 = vlaneseq
        %v293 = vshrl.u32 %v292, 7
        %v294 = vsub.s32 0, %v293
        %v295 = vrot.slane %v290, %v294
        %vm297 = vcmask 261120
        %v299 = vsel %vm297, %v285, 0
        %301 = vmatprep.subr.mxu0 0.0
        %302 = vmatpush1.msra.mxu0 %v286
        %303 = vmatprep.subr.mxu0 0.0
        %304 = vmatpush1.msra.mxu0 %v287
        %305 = vmatprep.subr.mxu0 0.0
        %306 = vmatpush1.msra.mxu0 %v288
        %307 = vmatprep.subr.mxu0 0.0
        %308 = vmatpush1.msra.mxu0 %v289
        %309 = vmatprep.subr.mxu0 0.0
        %310 = vmatpush1.msra.mxu0 0.0
        %311 = vmatprep.subr.mxu0 0.0
        %312 = vmatpush1.msra.mxu0 0.0
        %313 = vmatprep.subr.mxu0 0.0
        %314 = vmatpush1.msra.mxu0 0.0
        %315 = vmatprep.subr.mxu0 0.0
        %316 = vmatpush1.msra.mxu0 0.0
        %317 = vmatprep.subr.mxu0 0.0
        %318 = vmatpush1.msra.mxu0 0.0
        %319 = vmatprep.subr.mxu0 0.0
        %320 = vmatpush1.msra.mxu0 0.0
        %321 = vmatprep.subr.mxu0 0.0
        %322 = vmatpush1.msra.mxu0 0.0
        %323 = vmatprep.subr.mxu0 0.0
        %324 = vmatpush1.msra.mxu0 0.0
        %325 = vmatprep.subr.mxu0 0.0
        %326 = vmatpush1.msra.mxu0 0.0
        %327 = vmatprep.subr.mxu0 0.0
        %328 = vmatpush1.msra.mxu0 0.0
        %329 = vmatprep.subr.mxu0 0.0
        %330 = vmatpush1.msra.mxu0 0.0
        %331 = vmatprep.subr.mxu0 0.0
        %332 = vmatpush1.msra.mxu0 0.0
        %333 = vmatprep.subr.mxu0 0.0
        %334 = vmatpush1.msra.mxu0 0.0
        %335 = vmatprep.subr.mxu0 0.0
        %336 = vmatpush1.msra.mxu0 0.0
        %337 = vmatprep.subr.mxu0 0.0
        %338 = vmatpush1.msra.mxu0 0.0
        %339 = vmatprep.subr.mxu0 0.0
        %340 = vmatpush1.msra.mxu0 0.0
        %341 = vmatprep.subr.mxu0 0.0
        %342 = vmatpush1.msra.mxu0 0.0
        %343 = vmatprep.subr.mxu0 0.0
        %344 = vmatpush1.msra.mxu0 0.0
        %345 = vmatprep.subr.mxu0 0.0
        %346 = vmatpush1.msra.mxu0 0.0
        %347 = vmatprep.subr.mxu0 0.0
        %348 = vmatpush1.msra.mxu0 0.0
        %349 = vmatprep.subr.mxu0 0.0
        %350 = vmatpush1.msra.mxu0 0.0
        %351 = vmatprep.subr.mxu0 0.0
        %352 = vmatpush1.msra.mxu0 0.0
        %353 = vmatprep.subr.mxu0 0.0
        %354 = vmatpush1.msra.mxu0 0.0
        %355 = vmatprep.subr.mxu0 0.0
        %356 = vmatpush1.msra.mxu0 0.0
        %357 = vmatprep.subr.mxu0 0.0
        %358 = vmatpush1.msra.mxu0 0.0
        %359 = vmatprep.subr.mxu0 0.0
        %360 = vmatpush1.msra.mxu0 0.0
        %361 = vmatprep.subr.mxu0 0.0
        %362 = vmatpush1.msra.mxu0 0.0
        %363 = vmatprep.subr.mxu0 0.0
        %364 = vmatpush1.msra.mxu0 0.0
        %365 = vmatprep.mubr.f32.mxu0 0.0
        %366 = vmatmul.mubr.f32.gmra.mrb[0].mxu0 %v299
        %v367 = vpop.f32.mrb[0].mxu0
        %v368 = vadd.f32 %v295, %v367
        %v369 = vpop.f32.mrb[0].mxu0
        %370 = vdwg.mxu0
        %v371 = vmax.f32 %v368, 0.0
        %v372 = vld [vmem:[%s283] sm:$0xff]
        %v373 = vld [vmem:[%s283 + $0x8] sm:$0xff]
        %v374 = vld [vmem:[%s283 + $0x10] sm:$0xff]
        %v375 = vld [vmem:[%s283 + $0x18] sm:$0xff]
        %v376 = vld [vmem:[%s283 + $0x20] sm:$0xff]
        %v377 = vld [vmem:[%s283 + $0x28] sm:$0xff]
        %v378 = vld [vmem:[%s283 + $0x30] sm:$0xff]
        %v379 = vld [vmem:[%s283 + $0x38] sm:$0xff]
        %vm380 = vcmask 523264
        %v382 = vsel %vm380, %v371, 0
        %384 = vmatprep.subr.mxu0 0.0
        %385 = vmatpush1.msra.mxu0 %v372
        %386 = vmatprep.subr.mxu0 0.0
        %387 = vmatpush1.msra.mxu0 %v373
        %388 = vmatprep.subr.mxu0 0.0
        %389 = vmatpush1.msra.mxu0 %v374
        %390 = vmatprep.subr.mxu0 0.0
        %391 = vmatpush1.msra.mxu0 %v375
        %392 = vmatprep.subr.mxu0 0.0
        %393 = vmatpush1.msra.mxu0 %v376
        %394 = vmatprep.subr.mxu0 0.0
        %395 = vmatpush1.msra.mxu0 %v377
        %396 = vmatprep.subr.mxu0 0.0
        %397 = vmatpush1.msra.mxu0 %v378
        %398 = vmatprep.subr.mxu0 0.0
        %399 = vmatpush1.msra.mxu0 %v379
        %400 = vmatprep.subr.mxu0 0.0
        %401 = vmatpush1.msra.mxu0 0.0
        %402 = vmatprep.subr.mxu0 0.0
        %403 = vmatpush1.msra.mxu0 0.0
        %404 = vmatprep.subr.mxu0 0.0
        %405 = vmatpush1.msra.mxu0 0.0
        %406 = vmatprep.subr.mxu0 0.0
        %407 = vmatpush1.msra.mxu0 0.0
        %408 = vmatprep.subr.mxu0 0.0
        %409 = vmatpush1.msra.mxu0 0.0
        %410 = vmatprep.subr.mxu0 0.0
        %411 = vmatpush1.msra.mxu0 0.0
        %412 = vmatprep.subr.mxu0 0.0
        %413 = vmatpush1.msra.mxu0 0.0
        %414 = vmatprep.subr.mxu0 0.0
        %415 = vmatpush1.msra.mxu0 0.0
        %416 = vmatprep.subr.mxu0 0.0
        %417 = vmatpush1.msra.mxu0 0.0
        %418 = vmatprep.subr.mxu0 0.0
        %419 = vmatpush1.msra.mxu0 0.0
        %420 = vmatprep.subr.mxu0 0.0
        %421 = vmatpush1.msra.mxu0 0.0
        %422 = vmatprep.subr.mxu0 0.0
        %423 = vmatpush1.msra.mxu0 0.0
        %424 = vmatprep.subr.mxu0 0.0
        %425 = vmatpush1.msra.mxu0 0.0
        %426 = vmatprep.subr.mxu0 0.0
        %427 = vmatpush1.msra.mxu0 0.0
        %428 = vmatprep.subr.mxu0 0.0
        %429 = vmatpush1.msra.mxu0 0.0
        %430 = vmatprep.subr.mxu0 0.0
        %431 = vmatpush1.msra.mxu0 0.0
        %432 = vmatprep.subr.mxu0 0.0
        %433 = vmatpush1.msra.mxu0 0.0
        %434 = vmatprep.subr.mxu0 0.0
        %435 = vmatpush1.msra.mxu0 0.0
        %436 = vmatprep.subr.mxu0 0.0
        %437 = vmatpush1.msra.mxu0 0.0
        %438 = vmatprep.subr.mxu0 0.0
        %439 = vmatpush1.msra.mxu0 0.0
        %440 = vmatprep.subr.mxu0 0.0
        %441 = vmatpush1.msra.mxu0 0.0
        %442 = vmatprep.subr.mxu0 0.0
        %443 = vmatpush1.msra.mxu0 0.0
        %444 = vmatprep.subr.mxu0 0.0
        %445 = vmatpush1.msra.mxu0 0.0
        %446 = vmatprep.subr.mxu0 0.0
        %447 = vmatpush1.msra.mxu0 0.0
        %448 = vmatprep.mubr.f32.mxu0 0.0
        %449 = vmatmul.mubr.f32.gmra.mrb[0].mxu0 %v382
        %v450 = vpop.f32.mrb[0].mxu0
        %v451 = vadd.f32 0.0, %v450
        %v452 = vpop.f32.mrb[0].mxu0
        %453 = vdwg.mxu0
        %p454 = scmp.eq.s32.totalorder %s24, 0
        // Predicated region
        $region41: #{tpu_custom_call.1} parent=39 // pred_check
          %p455 = pneg %p454
        $region42: #{tpu_custom_call.1} parent=39 // pred_check_branch
          %457 = sbr.rel (%p455) target = $region44
        $region43: #{tpu_custom_call.1} parent=39 // pred_region
          %v458 = vld [vmem:[%s4] sm:$0x1]
          %v460 = vlaneseq
          %v461 = vshrl.u32 %v460, 7
          %v462 = vsub.s32 0, %v461
          %v463 = vrot.slane %v458, %v462
          %v465 = vadd.f32 %v451, %v463
          %466 = vst.msk [vmem:[%s267] sm:$0xff] %vm297, %v465
        $region44: #{tpu_custom_call.1} parent=39 // pred_fallthru
          _
        %p467 = scmp.gt.s32.totalorder %s24, 0
        // Predicated region
        $region45: #{tpu_custom_call.1} parent=39 // pred_check
          %p468 = pneg %p467
        $region46: #{tpu_custom_call.1} parent=39 // pred_check_branch
          %470 = sbr.rel (%p468) target = $region48
        $region47: #{tpu_custom_call.1} parent=39 // pred_region
          %v471 = vld [vmem:[%s267] sm:$0xff]
          %v472 = vadd.f32 %v471, %v451
          %473 = vst.msk [vmem:[%s267] sm:$0xff] %vm297, %v472
        $region48: #{tpu_custom_call.1} parent=39 // pred_fallthru
          _
        %s474 = sand.u32 %s164, 1
        %s475 = scalar_lea.sflag [#allocation3], %s474
        %s476 = sand.u32 %s164, 1
        %s477 = smul.addr %s476, 8
        %s478 = scalar_lea.vmem [#allocation2], %s477
        // Predicated region
        $region49: #{tpu_custom_call.1} parent=39 // pred_check
          %p479 = pneg %p174
        $region50: #{tpu_custom_call.1} parent=39 // pred_check_branch
          %481 = sbr.rel (%p479) target = $region52
        $region51: #{tpu_custom_call.1} parent=39 // pred_region
          %s483 = ssub.s32 128, 128
          %484 = vsyncadd %s475, %s483
          %s485 = smul.addr %s23, 128
          %s486 = scalar_lea.hbm %s5, %s485
          %s488 = sshll.u32 %s478, 4
          %s489 = int_to_ptr.vmem [resolvable:$true] %s488
          %491 = dma.vmem_to_hbm [thread:$0]  %s489, 128, %s486, %s475
        $region52: #{tpu_custom_call.1} parent=39 // pred_fallthru
          _
      $region40: #{tpu_custom_call.1} parent=5 // pred_fallthru
        _
      %p492 = scmp.le.s32.totalorder 2, %s14
      // Predicated region
      $region53: #{tpu_custom_call.1} parent=5 // pred_check
        %p493 = pneg %p492
      $region54: #{tpu_custom_call.1} parent=5 // pred_check_branch
        %495 = sbr.rel (%p493) target = $region56
      $region55: #{tpu_custom_call.1} parent=5 // pred_region
        %s496 = ssub.s32 %s14, 2
        // Predicated region
        $region57: #{tpu_custom_call.1} parent=55 // pred_check
          %p497 = pneg %p180
        $region58: #{tpu_custom_call.1} parent=55 // pred_check_branch
          %499 = sbr.rel (%p497) target = $region60
        $region59: #{tpu_custom_call.1} parent=55 // pred_region
          %s500 = sand.u32 %s165, 1
          %s501 = scalar_lea.sflag [#allocation3], %s500
          %s502 = sand.u32 %s165, 1
          %s503 = smul.addr %s502, 8
          %s504 = scalar_lea.vmem [#allocation2], %s503
          %505 = dma.done %s501, 128
        $region60: #{tpu_custom_call.1} parent=55 // pred_fallthru
          _
      $region56: #{tpu_custom_call.1} parent=5 // pred_fallthru
        _
    $region6: #{tpu_custom_call.1} parent=1 // loop_footer
      %s18 = sadd.s32 1, %s14
    $region7: #{tpu_custom_call.1} parent=1 // loop_footer_branch
      %13 = sbr.rel target = $region3
    $region8: #{tpu_custom_call.1} parent=1 // loop_exit
      _
    %506 = vsyncpa [#allocation3], 1
    %s507 = scalar_lea.sflag [#allocation3], 1
    %508 = vsyncpa %s507, 1

</llo_original>
